<compile_context>
chip_gen: v7x
topology: tpu7x:2x2x1
jax: 0.10.0
libtpu: 0.0.40
codegen_flags: <defaults>
</compile_context>

<pallas_src>
import functools

import jax
import jax.numpy as jnp
from jax.experimental import pallas as pl
from jax.experimental.pallas import tpu as pltpu


# --------------------------------------------------------------------------- #
# small helpers                                                               #
# --------------------------------------------------------------------------- #
def _cdiv(a, b):
    return (a + b - 1) // b


def _round_up(v, m):
    return _cdiv(v, m) * m


def _vmem_capacity_bytes():
    """Generation-aware VMEM capacity (v7x: 64 MiB/TC, v5e/v6e: 128 MiB)."""
    try:
        info = pltpu.get_tpu_info()
        cap = int(getattr(info, "vmem_capacity_bytes", 0))
        if cap > 0:
            return cap
    except Exception:
        pass
    return 64 << 20          # conservative default (works on every generation)


def _balanced_tile(n, cap, quantum, waste_tol=0.125):
    """Tile for an axis of length n: n itself when it fits under cap (a full-dim
    block is always layout-legal), else a multiple of `quantum` balancing
    quantisation waste against the number of tiles."""
    if n <= cap:
        return n
    hi = max(quantum, (min(cap, n) // quantum) * quantum)
    cands = list(range(quantum, hi + 1, quantum))
    tol = max(quantum, int(waste_tol * n))

    def stats(t):
        tiles = _cdiv(n, t)
        return tiles, tiles * t - n, -t

    ok = [t for t in cands if stats(t)[1] <= tol]
    if ok:
        return min(ok, key=stats)
    return min(cands, key=lambda t: (stats(t)[1], stats(t)[0], -t))


def _pick_batch_tile(b, cap):
    cap = max(8, cap)
    if b <= cap:
        return b                              # full dim: legal, zero waste
    return _balanced_tile(b, cap, 8)          # multiple of 8 (sublane constraint)


def _pick_len_tile(length, cap, want_align8):
    """Length-axis tile.  Multiple of 8 whenever possible (keeps the in-kernel
    (TB, rows, D) -> (TB*rows, D) row merge a free relabel)."""
    cap = max(8, cap)
    if length < 8:
        # TODO(synk): tiny L (<8) keeps the full dim; the in-kernel row merge may
        # need a Mosaic relayout in that edge case.
        return length
    if length <= cap and (length % 8 == 0 or not want_align8):
        return length
    return _balanced_tile(length, min(cap, (length // 8) * 8), 8)


def _pick_out_tile(d_out, d_in, cd_size, w_budget, acc_budget, tb_nominal):
    """D_out tile: whole weight VMEM-resident whenever it (and the accumulator)
    fits, so x is streamed from HBM exactly once.  Otherwise a 128-multiple."""
    tn_cap = min(w_budget // max(1, d_in * cd_size),
                 acc_budget // max(1, 4 * tb_nominal))
    if d_out <= tn_cap:
        return d_out
    tn_cap = max(128, min(512, (tn_cap // 128) * 128))
    return _balanced_tile(d_out, tn_cap, 128)


# --------------------------------------------------------------------------- #
# linear=True : fused  (x @ W^T) -> running max over L -> + bias -> ReLU       #
# --------------------------------------------------------------------------- #
def _linear_relu_maxpool_kernel(x_ref, w_ref, b_ref, o_ref, acc_ref, *,
                                valid_len, block_len, chunk_starts, chunk_len,
                                needs_mask, cast_dtype):
    l = pl.program_id(2)
    n_l = pl.num_programs(2)

    @pl.when(l == 0)
    def _init():
        acc_ref[...] = jnp.full(acc_ref.shape, -jnp.inf, dtype=acc_ref.dtype)

    tb, tl, d_in = x_ref.shape
    tn = acc_ref.shape[-1]

    def accumulate(apply_mask):
        # Static (fully unrolled, <=8 iterations) loop over row chunks of the
        # length tile: caps the live f32 matmul intermediate at ~(tb*chunk, tn)
        # instead of (tb*tl, tn), so it never round-trips through VMEM at size.
        for start in chunk_starts:
            rows = min(chunk_len, tl - start)
            xc = x_ref[:, start:start + rows, :]
            if cast_dtype is not None:
                xc = xc.astype(cast_dtype)          # per-block cast, no HBM cost
            # `rows` is a multiple of 8 (except the tiny L<8 edge case), so this
            # merge of (tb, rows) into the sublane axis is a free relabel.
            y = jnp.dot(xc.reshape(tb * rows, d_in), w_ref[...],
                        preferred_element_type=jnp.float32)
            y = y.reshape(tb, rows, tn)
            if apply_mask:                          # only traced for the tail step
                row_idx = (l * block_len + start
                           + jax.lax.broadcasted_iota(jnp.int32, (1, rows, 1), 1))
                y = jnp.where(row_idx < valid_len, y, -jnp.inf)
            acc_ref[...] = jnp.maximum(acc_ref[...], jnp.max(y, axis=1))

    if needs_mask:
        # Only the last L step can contain out-of-range rows; every other step
        # takes the unmasked fast path (saves the iota/cmp/select VALU work).
        @pl.when(l < n_l - 1)
        def _fast():
            accumulate(False)

        @pl.when(l == n_l - 1)
        def _masked():
            accumulate(True)
    else:
        accumulate(False)

    @pl.when(l == n_l - 1)
    def _finalize():
        z = acc_ref[...] + b_ref[...].astype(jnp.float32)   # bias AFTER max (exact)
        o_ref[...] = jnp.maximum(z, 0.0).astype(o_ref.dtype)


# --------------------------------------------------------------------------- #
# linear=False : plain running max over L                                     #
# --------------------------------------------------------------------------- #
def _maxpool_kernel(x_ref, o_ref, *, valid_len, block_len, needs_mask, fill_value):
    l = pl.program_id(2)
    n_l = pl.num_programs(2)

    @pl.when(l == 0)
    def _init():
        o_ref[...] = jnp.full(o_ref.shape, fill_value, dtype=o_ref.dtype)

    def accumulate(apply_mask):
        x = x_ref[...]
        if apply_mask:
            row_idx = (l * block_len
                       + jax.lax.broadcasted_iota(jnp.int32, (1, x.shape[1], 1), 1))
            x = jnp.where(row_idx < valid_len, x, fill_value)
        o_ref[...] = jnp.maximum(o_ref[...], jnp.max(x, axis=1))

    if needs_mask:
        @pl.when(l < n_l - 1)
        def _fast():
            accumulate(False)

        @pl.when(l == n_l - 1)
        def _masked():
            accumulate(True)
    else:
        accumulate(False)


# --------------------------------------------------------------------------- #
# wrapper                                                                     #
# --------------------------------------------------------------------------- #
def length_max_pool_1d(x, weight=None, bias=None, *, linear=False,
                       compute_dtype=None):
    """LengthMaxPool1D.forward.

    x      : [B, L, D_in]   (features last; the pool reduces over dim 1)
    weight : [D_out, D_in]  (PyTorch nn.Linear layout; required iff linear=True)
    bias   : [D_out]
    compute_dtype : optional lower-precision dtype (e.g. jnp.bfloat16) for the
        matmul inputs; the MXU still accumulates f32 and bias+ReLU run in f32.
    """
    assert x.ndim == 3, "expected x of shape [batch, length, features]"
    B, L, D_in = map(int, x.shape)
    out_dtype = x.dtype

    cap = _vmem_capacity_bytes()
    vmem_cap = (cap * 3) // 4              # compiler / pipeline headroom
    x_budget = cap // 16                   # ~4 MiB on v7x, ~8 MiB on v5e/v6e
    w_budget = cap // 8
    acc_budget = cap // 32
    y_budget = min(2 << 20, cap // 32)     # live f32 matmul-intermediate budget

    # ------------------------------- linear=False -------------------------- #
    if not linear:
        D = D_in
        itemsize = jnp.dtype(x.dtype).itemsize

        TD = D if D <= 2048 else _balanced_tile(D, 1024, 128)
        TB = _pick_batch_tile(B, min(512, max(8, x_budget // max(1, 8 * TD * itemsize))))
        TL = _pick_len_tile(L, max(8, x_budget // max(1, TB * TD * itemsize)),
                            want_align8=False)

        # Keep both v7x TensorCores busy when the parallel grid would be 1x1.
        if _cdiv(B, TB) * _cdiv(D, TD) == 1:
            if B >= 16:
                TB = _round_up(_cdiv(B, 2), 8)
            elif D >= 256:
                TD = max(128, _round_up(_cdiv(D, 2), 128))
            TL = _pick_len_tile(L, max(8, x_budget // max(1, TB * TD * itemsize)),
                                want_align8=False)

        needs_mask = (L % TL) != 0
        if jnp.issubdtype(x.dtype, jnp.floating):
            fill_value = float("-inf")
        elif jnp.issubdtype(x.dtype, jnp.integer):
            fill_value = int(jnp.iinfo(x.dtype).min)
        else:
            raise ValueError(f"unsupported dtype for max pooling: {x.dtype}")

        grid = (_cdiv(B, TB), _cdiv(D, TD), _cdiv(L, TL))
        x_blk = TB * TL * _round_up(TD, 128) * itemsize
        o_blk = _round_up(TB, 8) * _round_up(TD, 128) * itemsize
        vmem_limit = int(min(max(2 * (x_blk + o_blk) + (2 << 20), 32 << 20), vmem_cap))

        kernel = functools.partial(_maxpool_kernel, valid_len=L, block_len=TL,
                                   needs_mask=needs_mask, fill_value=fill_value)
        return pl.pallas_call(
            kernel,
            out_shape=jax.ShapeDtypeStruct((B, D), out_dtype),
            grid_spec=pltpu.PrefetchScalarGridSpec(
                num_scalar_prefetch=0,
                grid=grid,
                in_specs=[pl.BlockSpec((TB, TL, TD), lambda b, d, l: (b, l, d))],
                out_specs=pl.BlockSpec((TB, TD), lambda b, d, l: (b, d)),
            ),
            compiler_params=pltpu.CompilerParams(
                dimension_semantics=("parallel", "parallel", "arbitrary"),
                vmem_limit_bytes=vmem_limit),
        )(x)

    # ------------------------------- linear=True --------------------------- #
    assert weight is not None and bias is not None, "linear=True needs weight & bias"
    D_out, Dw_in = map(int, weight.shape)
    assert Dw_in == D_in, "weight must be [out_dim, in_dim]"

    cdtype = jnp.dtype(compute_dtype) if compute_dtype is not None else jnp.dtype(x.dtype)
    cd_size = cdtype.itemsize
    x_item = jnp.dtype(x.dtype).itemsize

    tb_nom = max(8, min(64, _round_up(B, 8)))
    TN = _pick_out_tile(D_out, D_in, cd_size, w_budget, acc_budget, tb_nom)

    TB_cap = min(256,
                 max(8, acc_budget // max(1, 4 * _round_up(TN, 128))),
                 max(8, x_budget // max(1, 8 * D_in * x_item)))
    TB = _pick_batch_tile(B, TB_cap)

    # Keep both v7x TensorCores busy when the parallel grid would be 1x1.
    if _cdiv(B, TB) * _cdiv(D_out, TN) == 1:
        if B >= 16:
            TB = _round_up(_cdiv(B, 2), 8)
        elif D_out >= 256:
            TN = max(128, _round_up(_cdiv(D_out, 2), 128))

    nn = _cdiv(D_out, TN)

    # Cast x in HBM only when the kernel will re-read it (once per D_out tile);
    # otherwise cast per-block inside the kernel (no extra HBM traffic).
    cast_needed = cdtype != x.dtype
    cast_in_wrapper = cast_needed and nn >= 2
    cast_in_kernel = cdtype if (cast_needed and not cast_in_wrapper) else None
    xk = x.astype(cdtype) if cast_in_wrapper else x
    xk_item = jnp.dtype(xk.dtype).itemsize

    rows_cap = max(8, x_budget // max(1, TB * D_in * xk_item))
    TL = _pick_len_tile(L, rows_cap, want_align8=True)
    n_chunks = max(1, min(8, _cdiv(TB * TL * _round_up(TN, 128) * 4, y_budget)))
    CL = min(TL, _round_up(_cdiv(TL, n_chunks), 8))
    chunk_starts = tuple(range(0, TL, CL))
    needs_mask = (L % TL) != 0

    # One-time wrapper-side transpose / cast: the kernel then issues a canonical
    # [M, K] x [K, N] MXU matmul (weight is tiny next to x).
    w_t = jnp.transpose(weight).astype(cdtype)               # [D_in, D_out]
    b2 = jnp.asarray(bias, jnp.float32).reshape(1, D_out)

    grid = (_cdiv(B, TB), nn, _cdiv(L, TL))

    tn_pad = _round_up(TN, 128)
    x_blk = TB * TL * D_in * xk_item
    w_blk = D_in * tn_pad * cd_size
    b_blk = tn_pad * 4
    o_blk = _round_up(TB, 8) * tn_pad * jnp.dtype(out_dtype).itemsize
    acc_blk = _round_up(TB, 8) * tn_pad * 4
    y_blk = _round_up(TB * CL, 8) * tn_pad * 4
    xc_blk = TB * CL * D_in * cd_size if cast_in_kernel is not None else 0
    need = 2 * (x_blk + w_blk + b_blk + o_blk) + acc_blk + 2 * (y_blk + xc_blk) + (2 << 20)
    vmem_limit = int(min(max(need, 32 << 20), vmem_cap))

    kernel = functools.partial(
        _linear_relu_maxpool_kernel,
        valid_len=L, block_len=TL, chunk_starts=chunk_starts, chunk_len=CL,
        needs_mask=needs_mask, cast_dtype=cast_in_kernel)

    # TODO(synk): on v5e, if profiling shows exposed x DMA, pass
    # pipeline_mode=pl.Buffered(3) on the x BlockSpec.
    return pl.pallas_call(
        kernel,
        out_shape=jax.ShapeDtypeStruct((B, D_out), out_dtype),
        grid_spec=pltpu.PrefetchScalarGridSpec(
            num_scalar_prefetch=0,
            grid=grid,
            in_specs=[
                pl.BlockSpec((TB, TL, D_in), lambda b, n, l: (b, l, 0)),
                pl.BlockSpec((D_in, TN), lambda b, n, l: (0, n)),
                pl.BlockSpec((1, TN), lambda b, n, l: (0, n)),
            ],
            out_specs=pl.BlockSpec((TB, TN), lambda b, n, l: (b, n)),
            scratch_shapes=[pltpu.VMEM((TB, TN), jnp.float32)],
        ),
        compiler_params=pltpu.CompilerParams(
            dimension_semantics=("parallel", "parallel", "arbitrary"),
            vmem_limit_bytes=vmem_limit),
        cost_estimate=pl.CostEstimate(
            flops=2 * B * L * D_in * D_out,
            transcendentals=0,
            bytes_accessed=(B * L * D_in * xk_item + D_in * D_out * cd_size
                            + D_out * 4 + B * D_out * jnp.dtype(out_dtype).itemsize)),
    )(xk, w_t, b2)


# --------------------------------------------------------------------------- #
# demo / self-check                                                           #
# --------------------------------------------------------------------------- #
if __name__ == "__main__":
    key = jax.random.PRNGKey(0)

    def check(B, L, D_in, D_out):
        kx, kw, kb = jax.random.split(
            jax.random.fold_in(key, B * 10000 + L * 100 + D_out), 3)
        x = jax.random.normal(kx, (B, L, D_in), dtype=jnp.float32)
        bound = 1.0 / (D_in ** 0.5)
        weight = jax.random.uniform(kw, (D_out, D_in), jnp.float32, -bound, bound)
        bias = jax.random.uniform(kb, (D_out,), jnp.float32, -bound, bound)

        out_linear = length_max_pool_1d(x, weight, bias, linear=True)
        out_plain = length_max_pool_1d(x, linear=False)
        jax.block_until_ready((out_linear, out_plain))

        ref_linear = jnp.max(
            jax.nn.relu(jnp.einsum("bld,od->blo", x, weight,
                                   precision=jax.lax.Precision.HIGHEST) + bias),
            axis=1)
        ref_plain = jnp.max(x, axis=1)

        assert out_linear.shape == (B, D_out), out_linear.shape
        assert out_plain.shape == (B, D_in), out_plain.shape
        assert jnp.allclose(out_linear, ref_linear, atol=1e-4, rtol=1e-4), \
            float(jnp.max(jnp.abs(out_linear - ref_linear)))
        assert jnp.allclose(out_plain, ref_plain, atol=1e-6, rtol=0.0)

    # Module-scale shapes (batch=2, seq=8, in_dim=32, out_dim=32).
    check(2, 8, 32, 32)
    # Ragged L (in-kernel tail mask on the last L step only), non-128 D_out, tiny B.
    check(3, 20, 48, 72)
    # Uneven batch: partial B tile handled by Pallas' partial write-back.
    check(20, 64, 128, 128)
    # Multi-chunk in-kernel matmul (live f32 intermediate capped ~<=2 MiB).
    check(32, 192, 256, 512)

    print("KERNEL_OK")
</pallas_src>

<mosaic_0001>
module attributes {stable_mosaic.version = 11 : i64} {
  func.func @_linear_relu_maxpool_kernel(%arg0: i32, %arg1: i32, %arg2: i32, %arg3: memref<2x8x32xf32, #tpu.memory_space<vmem>>, %arg4: memref<32x32xf32, #tpu.memory_space<vmem>>, %arg5: memref<1x32xf32, #tpu.memory_space<vmem>>, %arg6: memref<2x32xf32, #tpu.memory_space<vmem>>, %arg7: memref<2x32xf32, #tpu.memory_space<vmem>>) attributes {dimension_semantics = [#tpu.dimension_semantics<parallel>, #tpu.dimension_semantics<parallel>, #tpu.dimension_semantics<arbitrary>], iteration_bounds = array<i64: 1, 1, 1>, scalar_prefetch = 0 : i64, scratch_operands = 1 : i64, tpu.core_type = #tpu.core_type<tc>, window_params = [{transform_indices = @transform_0, window_bounds = array<i64: 2, 8, 32>}, {transform_indices = @transform_1, window_bounds = array<i64: 32, 32>}, {transform_indices = @transform_2, window_bounds = array<i64: 1, 32>}, {transform_indices = @transform_3, window_bounds = array<i64: 2, 32>}]} {
    %c0_i32 = arith.constant 0 : i32
    %0 = arith.cmpi eq, %arg2, %c0_i32 : i32
    %1 = arith.extui %0 : i1 to i32
    %c0_i32_0 = arith.constant 0 : i32
    %2 = arith.cmpi ne, %1, %c0_i32_0 : i32
    scf.if %2 {
      %cst_12 = arith.constant 0xFF800000 : f32
      %15 = vector.broadcast %cst_12 : f32 to vector<2x32xf32>
      %c0_13 = arith.constant 0 : index
      %c0_14 = arith.constant 0 : index
      %16 = vector.load %arg7[%c0_13, %c0_14] : memref<2x32xf32, #tpu.memory_space<vmem>>, vector<2x32xf32>
      tpu.vector_store %arg7[%c0_13, %c0_14], %15 {strides = array<i32>} : memref<2x32xf32, #tpu.memory_space<vmem>>, vector<2x32xf32>,
    } else {
    }
    %c0 = arith.constant 0 : index
    %c0_1 = arith.constant 0 : index
    %c0_2 = arith.constant 0 : index
    %3 = vector.load %arg3[%c0, %c0_1, %c0_2] : memref<2x8x32xf32, #tpu.memory_space<vmem>>, vector<2x8x32xf32>
    %4 = vector.shape_cast %3 : vector<2x8x32xf32> to vector<16x32xf32>
    %c0_3 = arith.constant 0 : index
    %c0_4 = arith.constant 0 : index
    %5 = vector.load %arg4[%c0_3, %c0_4] : memref<32x32xf32, #tpu.memory_space<vmem>>, vector<32x32xf32>
    %cst = arith.constant dense<0.000000e+00> : vector<16x32xf32>
    %6 = tpu.matmul %4, %5, %cst {dimension_numbers = #tpu.dot_dimension_numbers<[1], [0], [0], [1], [0, 0, 1, 1], [], []>} : vector<16x32xf32>, vector<32x32xf32>, vector<16x32xf32> -> vector<16x32xf32>
    %7 = vector.shape_cast %6 : vector<16x32xf32> to vector<2x8x32xf32>
    %c0_5 = arith.constant 0 : index
    %c0_6 = arith.constant 0 : index
    %8 = vector.load %arg7[%c0_5, %c0_6] : memref<2x32xf32, #tpu.memory_space<vmem>>, vector<2x32xf32>
    %cst_7 = arith.constant dense<0xFF800000> : vector<2x32xf32>
    %9 = vector.multi_reduction <maximumf>, %7, %cst_7 [1] : vector<2x8x32xf32> to vector<2x32xf32>
    %10 = arith.maximumf %8, %9 : vector<2x32xf32>
    %c0_8 = arith.constant 0 : index
    %c0_9 = arith.constant 0 : index
    %11 = vector.load %arg7[%c0_8, %c0_9] : memref<2x32xf32, #tpu.memory_space<vmem>>, vector<2x32xf32>
    tpu.vector_store %arg7[%c0_8, %c0_9], %10 {strides = array<i32>} : memref<2x32xf32, #tpu.memory_space<vmem>>, vector<2x32xf32>,
    %c0_i32_10 = arith.constant 0 : i32
    %12 = arith.cmpi eq, %arg2, %c0_i32_10 : i32
    %13 = arith.extui %12 : i1 to i32
    %c0_i32_11 = arith.constant 0 : i32
    %14 = arith.cmpi ne, %13, %c0_i32_11 : i32
    scf.if %14 {
      %c0_12 = arith.constant 0 : index
      %c0_13 = arith.constant 0 : index
      %15 = vector.load %arg7[%c0_12, %c0_13] : memref<2x32xf32, #tpu.memory_space<vmem>>, vector<2x32xf32>
      %c0_14 = arith.constant 0 : index
      %c0_15 = arith.constant 0 : index
      %16 = vector.load %arg5[%c0_14, %c0_15] : memref<1x32xf32, #tpu.memory_space<vmem>>, vector<1x32xf32>
      %17 = vector.broadcast %16 : vector<1x32xf32> to vector<2x32xf32>
      %18 = arith.addf %15, %17 : vector<2x32xf32>
      %cst_16 = arith.constant 0.000000e+00 : f32
      %19 = vector.broadcast %cst_16 : f32 to vector<2x32xf32>
      %20 = arith.maximumf %18, %19 : vector<2x32xf32>
      %c0_17 = arith.constant 0 : index
      %c0_18 = arith.constant 0 : index
      %21 = vector.load %arg6[%c0_17, %c0_18] : memref<2x32xf32, #tpu.memory_space<vmem>>, vector<2x32xf32>
      tpu.vector_store %arg6[%c0_17, %c0_18], %20 {strides = array<i32>} : memref<2x32xf32, #tpu.memory_space<vmem>>, vector<2x32xf32>,
    } else {
    }
    return
  }
  func.func @transform_0(%arg0: i32, %arg1: i32, %arg2: i32) -> (i32, i32, i32) {
    %c0_i32 = arith.constant 0 : i32
    %c0_i32_0 = arith.constant 0 : i32
    return %arg0, %arg2, %c0_i32 : i32, i32, i32
  }
  func.func @transform_1(%arg0: i32, %arg1: i32, %arg2: i32) -> (i32, i32) {
    %c0_i32 = arith.constant 0 : i32
    %c0_i32_0 = arith.constant 0 : i32
    return %c0_i32, %arg1 : i32, i32
  }
  func.func @transform_2(%arg0: i32, %arg1: i32, %arg2: i32) -> (i32, i32) {
    %c0_i32 = arith.constant 0 : i32
    %c0_i32_0 = arith.constant 0 : i32
    return %c0_i32, %arg1 : i32, i32
  }
  func.func @transform_3(%arg0: i32, %arg1: i32, %arg2: i32) -> (i32, i32) {
    %c0_i32 = arith.constant 0 : i32
    return %arg0, %arg1 : i32, i32
  }
}

</mosaic_0001>

<llo_original>
// kernel: tpu_custom_call.1
$region0: #{tpu_custom_call.1}
  #allocation0 [shape = 'u32[]', space=smem, size = 0x4, offset = 0x4, fixed_abs, tag = 'smem constant byte address 0x4 - core index']
  #allocation1 [shape = 'u32[144,128]{1,0:T(1,128)}', space=vmem, size = 0x12000, scoped, tag = 'internal scratch']
  #allocation2 [shape = 'f32[2,32]{1,0:T(2,128)}', space=vmem, size = 0x400, scoped, tag = 'scratch operand']
  %s0 = inlined_call_operand.hbm [shape: f32[2,8,32], index: 0, kind: input, shape index: {}]
  %s1 = inlined_call_operand.hbm [shape: f32[32,32], index: 1, kind: input, shape index: {}]
  %s2 = inlined_call_operand.vmem [shape: f32[1,32], index: 2, kind: input, shape index: {}]
  %s3 = inlined_call_operand.hbm [shape: f32[2,32], index: 3, kind: output, shape index: {}]
  %s4 = sld [smem:[#allocation0]]
  $region38: #{tpu_custom_call.1} parent=0
    _
  %s6 = ssub.s32 1, %s4
  %s7 = scalar_select 0, %s6, %s4
  $region1: #{tpu_custom_call.1} parent=0
    #allocation3 [shape = 'u8[8192]{0}', space=vmem, size = 0x2000, scoped, tag = 'input window, operand 0, single buffered']
    #allocation4 [shape = 's32[1]{0}', space=sflag, size = 0x4, scoped, tag = 'scoped memory for tpu_custom_call.1']
    #allocation5 [shape = 's32[1]{0}', space=sflag, size = 0x4, scoped, tag = 'scoped memory for tpu_custom_call.1']
    #allocation6 [shape = 'u8[16384]{0}', space=vmem, size = 0x4000, scoped, tag = 'input window, operand 1, single buffered']
    #allocation7 [shape = 's32[1]{0}', space=sflag, size = 0x4, scoped, tag = 'scoped memory for tpu_custom_call.1']
    #allocation8 [shape = 'u8[1024]{0}', space=vmem, size = 0x400, scoped, tag = 'output window, operand 0, single buffered']
    %8 = vsyncpa [#allocation4], 0
    %9 = vsyncpa [#allocation7], 0
    %10 = vsyncpa [#allocation5], 0
    // Predicated region
    $region2: #{tpu_custom_call.1} parent=1 // pred_check
      _
    $region3: #{tpu_custom_call.1} parent=1 // pred_check_branch
      %12 = sbr.rel (0) target = $region5
    $region4: #{tpu_custom_call.1} parent=1 // pred_region
      %s14 = ssub.s32 256, 256
      %15 = vsyncadd [#allocation4], %s14
      %s16 = sshll.u32 [#allocation3], 4
      %s17 = int_to_ptr.vmem [resolvable:$true] %s16
      %22 = dma.hbm_to_vmem [thread:$0]  %s0, 256, %s17, [#allocation4], 128, 128, 8
    $region5: #{tpu_custom_call.1} parent=1 // pred_fallthru
      _
    // Predicated region
    $region6: #{tpu_custom_call.1} parent=1 // pred_check
      _
    $region7: #{tpu_custom_call.1} parent=1 // pred_check_branch
      %24 = sbr.rel (0) target = $region9
    $region8: #{tpu_custom_call.1} parent=1 // pred_region
      %s26 = ssub.s32 512, 512
      %27 = vsyncadd [#allocation7], %s26
      %s28 = sshll.u32 [#allocation6], 4
      %s29 = int_to_ptr.vmem [resolvable:$true] %s28
      %34 = dma.hbm_to_vmem [thread:$0]  %s1, 512, %s29, [#allocation7], 128, 128, 8
    $region9: #{tpu_custom_call.1} parent=1 // pred_fallthru
      _
    // Predicated region
    $region10: #{tpu_custom_call.1} parent=1 // pred_check
      _
    $region11: #{tpu_custom_call.1} parent=1 // pred_check_branch
      %36 = sbr.rel (0) target = $region13
    $region12: #{tpu_custom_call.1} parent=1 // pred_region
      _
    $region13: #{tpu_custom_call.1} parent=1 // pred_fallthru
      _
    // Predicated region
    $region14: #{tpu_custom_call.1} parent=1 // pred_check
      _
    $region15: #{tpu_custom_call.1} parent=1 // pred_check_branch
      %38 = sbr.rel (0) target = $region17
    $region16: #{tpu_custom_call.1} parent=1 // pred_region
      %39 = dma.done [#allocation4], 256
    $region17: #{tpu_custom_call.1} parent=1 // pred_fallthru
      _
    // Predicated region
    $region18: #{tpu_custom_call.1} parent=1 // pred_check
      _
    $region19: #{tpu_custom_call.1} parent=1 // pred_check_branch
      %41 = sbr.rel (0) target = $region21
    $region20: #{tpu_custom_call.1} parent=1 // pred_region
      %42 = dma.done [#allocation7], 512
    $region21: #{tpu_custom_call.1} parent=1 // pred_fallthru
      _
    %p43 = scmp.eq.s32.totalorder 0, 0
    // Predicated region
    $region22: #{tpu_custom_call.1} parent=1 // pred_check
      %p44 = pneg %p43
    $region23: #{tpu_custom_call.1} parent=1 // pred_check_branch
      %46 = sbr.rel (%p44) target = $region25
    $region24: #{tpu_custom_call.1} parent=1 // pred_region
      %vm47 = vcmask 254976
      %48 = vst.msk [vmem:[#allocation2] sm:$0x3] %vm47, -inf
    $region25: #{tpu_custom_call.1} parent=1 // pred_fallthru
      _
    %v49 = vld [vmem:[#allocation3] sm:$0xff]
    %v50 = vld [vmem:[#allocation3 + $0x8] sm:$0xff]
    %v51 = vld [vmem:[#allocation6] sm:$0xff]
    %v52 = vld [vmem:[#allocation6 + $0x8] sm:$0xff]
    %v53 = vld [vmem:[#allocation6 + $0x10] sm:$0xff]
    %v54 = vld [vmem:[#allocation6 + $0x18] sm:$0xff]
    %vm55 = vcmask 261120
    %v57 = vsel %vm55, %v49, 0
    %v60 = vsel %vm55, %v50, 0
    %62 = vmatprep.subr.mxu0 0.0
    %63 = vmatpush1.msra.mxu0 %v51
    %64 = vmatprep.subr.mxu0 0.0
    %65 = vmatpush1.msra.mxu0 %v52
    %66 = vmatprep.subr.mxu0 0.0
    %67 = vmatpush1.msra.mxu0 %v53
    %68 = vmatprep.subr.mxu0 0.0
    %69 = vmatpush1.msra.mxu0 %v54
    %70 = vmatprep.subr.mxu0 0.0
    %71 = vmatpush1.msra.mxu0 0.0
    %72 = vmatprep.subr.mxu0 0.0
    %73 = vmatpush1.msra.mxu0 0.0
    %74 = vmatprep.subr.mxu0 0.0
    %75 = vmatpush1.msra.mxu0 0.0
    %76 = vmatprep.subr.mxu0 0.0
    %77 = vmatpush1.msra.mxu0 0.0
    %78 = vmatprep.subr.mxu0 0.0
    %79 = vmatpush1.msra.mxu0 0.0
    %80 = vmatprep.subr.mxu0 0.0
    %81 = vmatpush1.msra.mxu0 0.0
    %82 = vmatprep.subr.mxu0 0.0
    %83 = vmatpush1.msra.mxu0 0.0
    %84 = vmatprep.subr.mxu0 0.0
    %85 = vmatpush1.msra.mxu0 0.0
    %86 = vmatprep.subr.mxu0 0.0
    %87 = vmatpush1.msra.mxu0 0.0
    %88 = vmatprep.subr.mxu0 0.0
    %89 = vmatpush1.msra.mxu0 0.0
    %90 = vmatprep.subr.mxu0 0.0
    %91 = vmatpush1.msra.mxu0 0.0
    %92 = vmatprep.subr.mxu0 0.0
    %93 = vmatpush1.msra.mxu0 0.0
    %94 = vmatprep.subr.mxu0 0.0
    %95 = vmatpush1.msra.mxu0 0.0
    %96 = vmatprep.subr.mxu0 0.0
    %97 = vmatpush1.msra.mxu0 0.0
    %98 = vmatprep.subr.mxu0 0.0
    %99 = vmatpush1.msra.mxu0 0.0
    %100 = vmatprep.subr.mxu0 0.0
    %101 = vmatpush1.msra.mxu0 0.0
    %102 = vmatprep.subr.mxu0 0.0
    %103 = vmatpush1.msra.mxu0 0.0
    %104 = vmatprep.subr.mxu0 0.0
    %105 = vmatpush1.msra.mxu0 0.0
    %106 = vmatprep.subr.mxu0 0.0
    %107 = vmatpush1.msra.mxu0 0.0
    %108 = vmatprep.subr.mxu0 0.0
    %109 = vmatpush1.msra.mxu0 0.0
    %110 = vmatprep.subr.mxu0 0.0
    %111 = vmatpush1.msra.mxu0 0.0
    %112 = vmatprep.subr.mxu0 0.0
    %113 = vmatpush1.msra.mxu0 0.0
    %114 = vmatprep.subr.mxu0 0.0
    %115 = vmatpush1.msra.mxu0 0.0
    %116 = vmatprep.subr.mxu0 0.0
    %117 = vmatpush1.msra.mxu0 0.0
    %118 = vmatprep.subr.mxu0 0.0
    %119 = vmatpush1.msra.mxu0 0.0
    %120 = vmatprep.subr.mxu0 0.0
    %121 = vmatpush1.msra.mxu0 0.0
    %122 = vmatprep.subr.mxu0 0.0
    %123 = vmatpush1.msra.mxu0 0.0
    %124 = vmatprep.subr.mxu0 0.0
    %125 = vmatpush1.msra.mxu0 0.0
    %126 = vmatprep.mubr.f32.mxu0 0.0
    %127 = vmatmul.mubr.f32.gmra.mrb[0].mxu0 %v57
    %v128 = vpop.f32.mrb[0].mxu0
    %v129 = vadd.f32 0.0, %v128
    %v130 = vpop.f32.mrb[0].mxu0
    %131 = vmatprep.mubr.f32.mxu0 0.0
    %132 = vmatmul.mubr.f32.gmra.mrb[0].mxu0 %v60
    %v133 = vpop.f32.mrb[0].mxu0
    %v134 = vadd.f32 0.0, %v133
    %v135 = vpop.f32.mrb[0].mxu0
    %136 = vdwg.mxu0
    %v137 = vld [vmem:[#allocation2] sm:$0x3]
    %v138 = vsel %vm55, %v129, -inf
    %v139 = vrot.slane %v138, 4
    %v140 = vmax.f32 %v138, %v139
    %v141 = vrot.slane %v140, 2
    %v142 = vmax.f32 %v140, %v141
    %v143 = vrot.slane %v142, 1
    %v144 = vmax.f32 %v142, %v143
    %v145 = vsel %vm55, %v134, -inf
    %v146 = vrot.slane %v145, 4
    %v147 = vmax.f32 %v145, %v146
    %v148 = vrot.slane %v147, 2
    %v149 = vmax.f32 %v147, %v148
    %v150 = vrot.slane %v149, 1
    %v151 = vmax.f32 %v149, %v150
    %vm154 = vcmask 1041409
    %v155 = vsel %vm154, %v151, %v144
    %v157 = vmax.f32 %v137, %v155
    %vm158 = vcmask 254976
    %159 = vst.msk [vmem:[#allocation2] sm:$0x3] %vm158, %v157
    // Predicated region
    $region26: #{tpu_custom_call.1} parent=1 // pred_check
      %p160 = pneg %p43
    $region27: #{tpu_custom_call.1} parent=1 // pred_check_branch
      %162 = sbr.rel (%p160) target = $region29
    $region28: #{tpu_custom_call.1} parent=1 // pred_region
      %v163 = vld [vmem:[#allocation2] sm:$0x3]
      %v164 = vld [vmem:[%s2] sm:$0x1]
      %v166 = vlaneseq
      %v167 = vshrl.u32 %v166, 7
      %v168 = vsub.s32 0, %v167
      %v169 = vrot.slane %v164, %v168
      %v171 = vadd.f32 %v163, %v169
      %v172 = vmax.f32 %v171, 0.0
      %173 = vst.msk [vmem:[#allocation8] sm:$0x3] %vm158, %v172
    $region29: #{tpu_custom_call.1} parent=1 // pred_fallthru
      _
    // Predicated region
    $region30: #{tpu_custom_call.1} parent=1 // pred_check
      _
    $region31: #{tpu_custom_call.1} parent=1 // pred_check_branch
      %175 = sbr.rel (0) target = $region33
    $region32: #{tpu_custom_call.1} parent=1 // pred_region
      %s177 = ssub.s32 32, 32
      %178 = vsyncadd [#allocation5], %s177
      %s180 = sshll.u32 [#allocation8], 4
      %s181 = int_to_ptr.vmem [resolvable:$true] %s180
      %183 = dma.vmem_to_hbm [thread:$0]  %s181, 32, %s3, [#allocation5]
    $region33: #{tpu_custom_call.1} parent=1 // pred_fallthru
      _
    // Predicated region
    $region34: #{tpu_custom_call.1} parent=1 // pred_check
      _
    $region35: #{tpu_custom_call.1} parent=1 // pred_check_branch
      %185 = sbr.rel (0) target = $region37
    $region36: #{tpu_custom_call.1} parent=1 // pred_region
      %186 = dma.done [#allocation5], 32
    $region37: #{tpu_custom_call.1} parent=1 // pred_fallthru
      _
    %187 = vsyncpa [#allocation4], 1
    %188 = vsyncpa [#allocation7], 1
    %189 = vsyncpa [#allocation5], 1

</llo_original>
